<compile_context>
chip_gen: v5e
topology: v5e:2x2
jax: 0.10.0
libtpu: 0.0.40
codegen_flags: <defaults>
</compile_context>

<pallas_src>
import functools
import math

import jax
import jax.numpy as jnp
from jax import lax
from jax.experimental import pallas as pl
from jax.experimental.pallas import tpu as pltpu  # noqa: F401  (TPU backend)

# ---------------- model hyperparameters (small, consistent with the module) ---
MAX_LEN = 8        # max_len_input / sequence length (power of two)
VOCAB = 64         # vocab_size
EMBED = 32         # embed_dim
FF_DIM = 64        # feed_forward_dim
NUM_HEADS = 2      # num_heads
KEY_DIM = 16       # key_dim  (num_heads * key_dim == embed_dim)
BATCH = 2

VOCAB_PAD = 128    # lane-dense LM-head width (multiple of 128)
LN_EPS = 1e-5      # python float (kept out of the kernel closure as jnp const)


def _layernorm(z, gamma, beta):
    mu = jnp.mean(z, axis=-1, keepdims=True)
    var = jnp.mean((z - mu) ** 2, axis=-1, keepdims=True)
    return (z - mu) * lax.rsqrt(var + LN_EPS) * gamma + beta


def gpt_kernel(ids_ref, pos_ref, tok_emb_ref,
               wqkv_ref, wo_ref, w1_ref, w2_ref, wout_ref,
               smallp_ref, out_ref, *, seq_len):
    """Full forward pass on the flattened (B*S, D) activation slab."""
    N = pos_ref.shape[0]                         # B*S
    V, D = tok_emb_ref.shape
    H, K = NUM_HEADS, KEY_DIM
    HK = H * K
    S = seq_len                                  # static python int
    seq_shift = S.bit_length() - 1               # log2(S)
    scale = 1.0 / math.sqrt(K)                   # python float -> literal
    bf16 = jnp.bfloat16

    # ---- unpack the single packed small-operand (static slices, all tiny) ----
    small = smallp_ref[...]                      # (8, 128) f32
    b_qkv = small[0:1, 0:3 * HK]                 # (1, 3*H*K)
    b_1   = small[1:2, 0:FF_DIM]                 # (1, FF_DIM)
    b_out = small[2:3, :]                        # (1, VOCAB_PAD)
    b_o   = small[3:4, 0:D]                      # (1, D)
    ln1_g = small[3:4, D:2 * D]
    ln1_b = small[3:4, 2 * D:3 * D]
    b_2   = small[4:5, 0:D]
    ln2_g = small[4:5, D:2 * D]
    ln2_b = small[4:5, 2 * D:3 * D]

    # ---- token + position embedding (one-hot gather on the MXU, bf16) --------
    ids = ids_ref[...]                                          # (N, 1) int32
    vocab_iota = lax.broadcasted_iota(jnp.int32, (N, V), 1)
    one_hot = (vocab_iota == ids).astype(bf16)                  # (N, V)
    tok = jnp.dot(one_hot, tok_emb_ref[...],
                  preferred_element_type=jnp.float32)           # (N, D) f32
    x = tok + pos_ref[...]                                      # pos pre-tiled

    # ---- fused QKV projection (bf16 operands, f32 accumulation) --------------
    qkv = jnp.dot(x.astype(bf16), wqkv_ref[...],
                  preferred_element_type=jnp.float32) + b_qkv   # (N, 3*H*K)

    # ---- stack heads along sublanes: one score matmul / one p@v for all heads
    q_stack = jnp.concatenate([qkv[:, h * K:(h + 1) * K]
                               for h in range(H)], axis=0)              # (H*N, K)
    k_stack = jnp.concatenate([qkv[:, HK + h * K: HK + (h + 1) * K]
                               for h in range(H)], axis=0)              # (H*N, K)
    v_stack = jnp.concatenate([qkv[:, 2 * HK + h * K: 2 * HK + (h + 1) * K]
                               for h in range(H)], axis=0)              # (H*N, K)

    M = H * N
    # Flat block-causal mask over (H*B*S, H*B*S): contiguous blocks of S rows
    # are homogeneous in (head, batch), so same block <=> same head AND batch.
    row = lax.broadcasted_iota(jnp.int32, (M, M), 0)
    col = lax.broadcasted_iota(jnp.int32, (M, M), 1)
    mask = ((row >> seq_shift) == (col >> seq_shift)) & (row >= col)

    s = lax.dot_general(q_stack.astype(bf16), k_stack.astype(bf16),
                        (((1,), (1,)), ((), ())),
                        preferred_element_type=jnp.float32) * scale     # (M, M)
    s = jnp.where(mask, s, -1e9)
    s = s - jnp.max(s, axis=-1, keepdims=True)
    p = jnp.exp(s)
    p = p * pl.reciprocal(jnp.sum(p, axis=-1, keepdims=True), approx=True)
    ctx_stack = jnp.dot(p.astype(bf16), v_stack.astype(bf16),
                        preferred_element_type=jnp.float32)             # (M, K)

    # un-stack heads back onto lanes and do ONE output projection
    ctx = jnp.concatenate([ctx_stack[h * N:(h + 1) * N]
                           for h in range(H)], axis=-1)                 # (N, H*K)
    attn = jnp.dot(ctx.astype(bf16), wo_ref[...],
                   preferred_element_type=jnp.float32) + b_o            # (N, D)

    # TODO(synk): dropout layers are identity (eval-mode / deterministic) here.
    h1 = _layernorm(x + attn, ln1_g, ln1_b)

    # ---- feed-forward (bf16 MXU, f32 elementwise) -----------------------------
    ff = jnp.dot(h1.astype(bf16), w1_ref[...],
                 preferred_element_type=jnp.float32) + b_1
    ff = jnp.maximum(ff, 0.0)
    ff = jnp.dot(ff.astype(bf16), w2_ref[...],
                 preferred_element_type=jnp.float32) + b_2
    h2 = _layernorm(h1 + ff, ln2_g, ln2_b)

    # ---- LM head: lane-dense (VOCAB padded to 128) store ----------------------
    out_ref[...] = jnp.dot(h2.astype(bf16), wout_ref[...],
                           preferred_element_type=jnp.float32) + b_out


def pack_params(params):
    """One-time packing: fused QKV, bf16 weights, padded LM head, one small op."""
    hk = NUM_HEADS * KEY_DIM
    wqkv = jnp.concatenate([params["wq"], params["wk"], params["wv"]], axis=1)
    bqkv = jnp.concatenate([params["bq"], params["bk"], params["bv"]], axis=1)
    wout_pad = jnp.pad(params["wout"], ((0, 0), (0, VOCAB_PAD - VOCAB)))
    bout_pad = jnp.pad(params["bout"], ((0, 0), (0, VOCAB_PAD - VOCAB)))

    # single (8, 128) f32 pack for every bias / LayerNorm vector
    smallp = jnp.zeros((8, VOCAB_PAD), jnp.float32)
    smallp = smallp.at[0, :3 * hk].set(bqkv[0])
    smallp = smallp.at[1, :FF_DIM].set(params["b1"][0])
    smallp = smallp.at[2, :].set(bout_pad[0])
    smallp = smallp.at[3, 0:EMBED].set(params["bo"][0])
    smallp = smallp.at[3, EMBED:2 * EMBED].set(params["ln1_g"][0])
    smallp = smallp.at[3, 2 * EMBED:3 * EMBED].set(params["ln1_b"][0])
    smallp = smallp.at[4, 0:EMBED].set(params["b2"][0])
    smallp = smallp.at[4, EMBED:2 * EMBED].set(params["ln2_g"][0])
    smallp = smallp.at[4, 2 * EMBED:3 * EMBED].set(params["ln2_b"][0])

    return {
        "tok_emb": params["tok_emb"].astype(jnp.bfloat16),
        "pos_emb": params["pos_emb"].astype(jnp.float32),
        "wqkv": wqkv.astype(jnp.bfloat16),
        "wo": params["wo"].astype(jnp.bfloat16),
        "w1": params["w1"].astype(jnp.bfloat16),
        "w2": params["w2"].astype(jnp.bfloat16),
        "wout_pad": wout_pad.astype(jnp.bfloat16),
        "smallp": smallp,
    }


@jax.jit
def gpt_forward(token_ids, packed):
    """token_ids: (B, S) int32 -> logits (B, S, VOCAB) float32."""
    B, S = token_ids.shape
    assert S & (S - 1) == 0, "sequence length must be a power of two"
    assert S <= MAX_LEN
    N = B * S
    HK = NUM_HEADS * KEY_DIM
    M = NUM_HEADS * N

    ids = token_ids.reshape(N, 1).astype(jnp.int32)
    # pre-tile position embedding to the flattened token slab (wrapper-side).
    pos_tiled = jnp.tile(packed["pos_emb"][:S], (B, 1))          # (N, D) f32

    flops = (2 * N * VOCAB * EMBED                # one-hot token gather
             + 2 * N * EMBED * 3 * HK             # fused QKV projection
             + 2 * M * M * KEY_DIM * 2            # scores + p@v (heads stacked)
             + 2 * N * HK * EMBED                 # attention output projection
             + 2 * N * EMBED * FF_DIM * 2         # feed-forward
             + 2 * N * EMBED * VOCAB_PAD)         # LM head
    transcendentals = M * M + 4 * N
    bytes_accessed = (ids.size * 4 + pos_tiled.size * 4
                      + packed["tok_emb"].size * 2 + packed["wqkv"].size * 2
                      + packed["wo"].size * 2 + packed["w1"].size * 2
                      + packed["w2"].size * 2 + packed["wout_pad"].size * 2
                      + packed["smallp"].size * 4
                      + N * VOCAB_PAD * 4)

    # No grid: the whole (tiny) problem runs in one invocation, all operands in
    # VMEM (weights + activations are a few tens of KB).
    logits_pad = pl.pallas_call(
        functools.partial(gpt_kernel, seq_len=S),
        out_shape=jax.ShapeDtypeStruct((N, VOCAB_PAD), jnp.float32),
        cost_estimate=pl.CostEstimate(flops=flops,
                                      transcendentals=transcendentals,
                                      bytes_accessed=bytes_accessed),
    )(ids, pos_tiled, packed["tok_emb"], packed["wqkv"], packed["wo"],
      packed["w1"], packed["w2"], packed["wout_pad"], packed["smallp"])

    return logits_pad[:, :VOCAB].reshape(B, S, VOCAB)


def init_params(key):
    """Deterministic synthetic parameters matching the module's shapes."""
    ks = jax.random.split(key, 16)
    hk = NUM_HEADS * KEY_DIM

    def dense(k, fan_in, fan_out):
        scale = 1.0 / math.sqrt(fan_in)
        return jax.random.uniform(k, (fan_in, fan_out), jnp.float32, -scale, scale)

    return {
        "tok_emb": jax.random.normal(ks[0], (VOCAB, EMBED), jnp.float32) * 0.02,
        "pos_emb": jax.random.normal(ks[1], (MAX_LEN, EMBED), jnp.float32) * 0.02,
        "wq": dense(ks[2], EMBED, hk),  "bq": jnp.zeros((1, hk), jnp.float32),
        "wk": dense(ks[3], EMBED, hk),  "bk": jnp.zeros((1, hk), jnp.float32),
        "wv": dense(ks[4], EMBED, hk),  "bv": jnp.zeros((1, hk), jnp.float32),
        "wo": dense(ks[5], hk, EMBED),  "bo": jnp.zeros((1, EMBED), jnp.float32),
        "ln1_g": jnp.ones((1, EMBED), jnp.float32),
        "ln1_b": jnp.zeros((1, EMBED), jnp.float32),
        "ln2_g": jnp.ones((1, EMBED), jnp.float32),
        "ln2_b": jnp.zeros((1, EMBED), jnp.float32),
        "w1": dense(ks[6], EMBED, FF_DIM), "b1": jnp.zeros((1, FF_DIM), jnp.float32),
        "w2": dense(ks[7], FF_DIM, EMBED), "b2": jnp.zeros((1, EMBED), jnp.float32),
        "wout": dense(ks[8], EMBED, VOCAB),
        "bout": jnp.zeros((1, VOCAB), jnp.float32),
    }


def gpt_forward_ref(token_ids, params):
    """Pure-JAX f32 reference for validation."""
    tok = jnp.take(params["tok_emb"], token_ids, axis=0)
    x = tok + params["pos_emb"][None, :token_ids.shape[1], :]
    q = x @ params["wq"] + params["bq"]
    k = x @ params["wk"] + params["bk"]
    v = x @ params["wv"] + params["bv"]
    B, S, _ = x.shape
    qh = q.reshape(B, S, NUM_HEADS, KEY_DIM).transpose(0, 2, 1, 3)
    kh = k.reshape(B, S, NUM_HEADS, KEY_DIM).transpose(0, 2, 1, 3)
    vh = v.reshape(B, S, NUM_HEADS, KEY_DIM).transpose(0, 2, 1, 3)
    s = jnp.einsum("bhqd,bhkd->bhqk", qh, kh) / math.sqrt(KEY_DIM)
    mask = jnp.tril(jnp.ones((S, S), bool))
    s = jnp.where(mask, s, -1e9)
    p = jax.nn.softmax(s, axis=-1)
    attn = jnp.einsum("bhqk,bhkd->bhqd", p, vh).transpose(0, 2, 1, 3).reshape(B, S, -1)
    attn = attn @ params["wo"] + params["bo"]

    def ln(z, g, b):
        mu = z.mean(-1, keepdims=True)
        var = ((z - mu) ** 2).mean(-1, keepdims=True)
        return (z - mu) / jnp.sqrt(var + LN_EPS) * g + b

    h1 = ln(x + attn, params["ln1_g"], params["ln1_b"])
    ff = jnp.maximum(h1 @ params["w1"] + params["b1"], 0.0) @ params["w2"] + params["b2"]
    h2 = ln(h1 + ff, params["ln2_g"], params["ln2_b"])
    return h2 @ params["wout"] + params["bout"]


if __name__ == "__main__":
    key = jax.random.PRNGKey(0)
    k_param, k_tok = jax.random.split(key)
    params = init_params(k_param)
    packed = pack_params(params)
    token_ids = jax.random.randint(k_tok, (BATCH, MAX_LEN), 0, VOCAB, dtype=jnp.int32)

    logits = gpt_forward(token_ids, packed)
    logits = jax.block_until_ready(logits)

    ref = gpt_forward_ref(token_ids, params)
    assert logits.shape == (BATCH, MAX_LEN, VOCAB)
    max_err = float(jnp.max(jnp.abs(logits - ref)))
    # tolerance accounts for bf16 MXU operands (all matmuls) and the
    # approx-reciprocal softmax denominator vs. the pure-f32 reference.
    assert max_err < 7.5e-2, max_err
    print("KERNEL_OK")
</pallas_src>

<mosaic_0001>
module attributes {stable_mosaic.version = 11 : i64} {
  func.func @gpt_kernel(%arg0: memref<16x1xi32, #tpu.memory_space<vmem>>, %arg1: memref<16x32xf32, #tpu.memory_space<vmem>>, %arg2: memref<64x32xbf16, #tpu.memory_space<vmem>>, %arg3: memref<32x96xbf16, #tpu.memory_space<vmem>>, %arg4: memref<32x32xbf16, #tpu.memory_space<vmem>>, %arg5: memref<32x64xbf16, #tpu.memory_space<vmem>>, %arg6: memref<64x32xbf16, #tpu.memory_space<vmem>>, %arg7: memref<32x128xbf16, #tpu.memory_space<vmem>>, %arg8: memref<8x128xf32, #tpu.memory_space<vmem>>, %arg9: memref<16x128xf32, #tpu.memory_space<vmem>>) attributes {dimension_semantics = [], scalar_prefetch = 0 : i64, scratch_operands = 0 : i64, tpu.core_type = #tpu.core_type<tc>} {
    %c0 = arith.constant 0 : index
    %c0_0 = arith.constant 0 : index
    %0 = vector.load %arg8[%c0, %c0_0] : memref<8x128xf32, #tpu.memory_space<vmem>>, vector<8x128xf32>
    %1 = vector.extract_strided_slice %0 {offsets = [0, 0], sizes = [1, 96], strides = [1, 1]} : vector<8x128xf32> to vector<1x96xf32>
    %2 = vector.extract_strided_slice %0 {offsets = [1, 0], sizes = [1, 64], strides = [1, 1]} : vector<8x128xf32> to vector<1x64xf32>
    %3 = vector.extract_strided_slice %0 {offsets = [2, 0], sizes = [1, 128], strides = [1, 1]} : vector<8x128xf32> to vector<1x128xf32>
    %4 = vector.extract_strided_slice %0 {offsets = [3, 0], sizes = [1, 32], strides = [1, 1]} : vector<8x128xf32> to vector<1x32xf32>
    %5 = vector.extract_strided_slice %0 {offsets = [3, 32], sizes = [1, 32], strides = [1, 1]} : vector<8x128xf32> to vector<1x32xf32>
    %6 = vector.extract_strided_slice %0 {offsets = [3, 64], sizes = [1, 32], strides = [1, 1]} : vector<8x128xf32> to vector<1x32xf32>
    %7 = vector.extract_strided_slice %0 {offsets = [4, 0], sizes = [1, 32], strides = [1, 1]} : vector<8x128xf32> to vector<1x32xf32>
    %8 = vector.extract_strided_slice %0 {offsets = [4, 32], sizes = [1, 32], strides = [1, 1]} : vector<8x128xf32> to vector<1x32xf32>
    %9 = vector.extract_strided_slice %0 {offsets = [4, 64], sizes = [1, 32], strides = [1, 1]} : vector<8x128xf32> to vector<1x32xf32>
    %c0_1 = arith.constant 0 : index
    %c0_2 = arith.constant 0 : index
    %10 = vector.load %arg0[%c0_1, %c0_2] : memref<16x1xi32, #tpu.memory_space<vmem>>, vector<16x1xi32>
    %11 = tpu.iota {dimensions = array<i32: 1>} : vector<16x64xi32>
    %12 = vector.broadcast %10 : vector<16x1xi32> to vector<16x64xi32>
    %13 = arith.cmpi eq, %11, %12 : vector<16x64xi32>
    %14 = arith.extui %13 : vector<16x64xi1> to vector<16x64xi32>
    %15 = arith.sitofp %14 : vector<16x64xi32> to vector<16x64xf32>
    %16 = arith.truncf %15 : vector<16x64xf32> to vector<16x64xbf16>
    %c0_3 = arith.constant 0 : index
    %c0_4 = arith.constant 0 : index
    %17 = vector.load %arg2[%c0_3, %c0_4] : memref<64x32xbf16, #tpu.memory_space<vmem>>, vector<64x32xbf16>
    %cst = arith.constant dense<0.000000e+00> : vector<16x32xf32>
    %18 = tpu.matmul %16, %17, %cst {dimension_numbers = #tpu.dot_dimension_numbers<[1], [0], [0], [1], [0, 0, 1, 1], [], []>} : vector<16x64xbf16>, vector<64x32xbf16>, vector<16x32xf32> -> vector<16x32xf32>
    %c0_5 = arith.constant 0 : index
    %c0_6 = arith.constant 0 : index
    %19 = vector.load %arg1[%c0_5, %c0_6] : memref<16x32xf32, #tpu.memory_space<vmem>>, vector<16x32xf32>
    %20 = arith.addf %18, %19 : vector<16x32xf32>
    %21 = arith.truncf %20 : vector<16x32xf32> to vector<16x32xbf16>
    %c0_7 = arith.constant 0 : index
    %c0_8 = arith.constant 0 : index
    %22 = vector.load %arg3[%c0_7, %c0_8] : memref<32x96xbf16, #tpu.memory_space<vmem>>, vector<32x96xbf16>
    %cst_9 = arith.constant dense<0.000000e+00> : vector<16x96xf32>
    %23 = tpu.matmul %21, %22, %cst_9 {dimension_numbers = #tpu.dot_dimension_numbers<[1], [0], [0], [1], [0, 0, 1, 1], [], []>} : vector<16x32xbf16>, vector<32x96xbf16>, vector<16x96xf32> -> vector<16x96xf32>
    %24 = vector.broadcast %1 : vector<1x96xf32> to vector<16x96xf32>
    %25 = arith.addf %23, %24 : vector<16x96xf32>
    %26 = vector.extract_strided_slice %25 {offsets = [0, 0], sizes = [16, 16], strides = [1, 1]} : vector<16x96xf32> to vector<16x16xf32>
    %27 = vector.extract_strided_slice %25 {offsets = [0, 16], sizes = [16, 16], strides = [1, 1]} : vector<16x96xf32> to vector<16x16xf32>
    %28 = tpu.concatenate %26, %27 in 0 : vector<16x16xf32>, vector<16x16xf32> -> vector<32x16xf32>
    %29 = vector.extract_strided_slice %25 {offsets = [0, 32], sizes = [16, 16], strides = [1, 1]} : vector<16x96xf32> to vector<16x16xf32>
    %30 = vector.extract_strided_slice %25 {offsets = [0, 48], sizes = [16, 16], strides = [1, 1]} : vector<16x96xf32> to vector<16x16xf32>
    %31 = tpu.concatenate %29, %30 in 0 : vector<16x16xf32>, vector<16x16xf32> -> vector<32x16xf32>
    %32 = vector.extract_strided_slice %25 {offsets = [0, 64], sizes = [16, 16], strides = [1, 1]} : vector<16x96xf32> to vector<16x16xf32>
    %33 = vector.extract_strided_slice %25 {offsets = [0, 80], sizes = [16, 16], strides = [1, 1]} : vector<16x96xf32> to vector<16x16xf32>
    %34 = tpu.concatenate %32, %33 in 0 : vector<16x16xf32>, vector<16x16xf32> -> vector<32x16xf32>
    %35 = tpu.iota {dimensions = array<i32: 0>} : vector<32x32xi32>
    %36 = tpu.iota {dimensions = array<i32: 1>} : vector<32x32xi32>
    %c3_i32 = arith.constant 3 : i32
    %37 = vector.broadcast %c3_i32 : i32 to vector<32x32xi32>
    %38 = arith.shrsi %35, %37 : vector<32x32xi32>
    %c3_i32_10 = arith.constant 3 : i32
    %39 = vector.broadcast %c3_i32_10 : i32 to vector<32x32xi32>
    %40 = arith.shrsi %36, %39 : vector<32x32xi32>
    %41 = arith.cmpi eq, %38, %40 : vector<32x32xi32>
    %42 = arith.cmpi sge, %35, %36 : vector<32x32xi32>
    %43 = arith.andi %41, %42 : vector<32x32xi1>
    %44 = arith.truncf %28 : vector<32x16xf32> to vector<32x16xbf16>
    %45 = arith.truncf %31 : vector<32x16xf32> to vector<32x16xbf16>
    %cst_11 = arith.constant dense<0.000000e+00> : vector<32x32xf32>
    %46 = tpu.matmul %44, %45, %cst_11 {dimension_numbers = #tpu.dot_dimension_numbers<[1], [1], [0], [0], [0, 0, 1, 0], [], []>} : vector<32x16xbf16>, vector<32x16xbf16>, vector<32x32xf32> -> vector<32x32xf32>
    %cst_12 = arith.constant 2.500000e-01 : f32
    %47 = vector.broadcast %cst_12 : f32 to vector<32x32xf32>
    %48 = arith.mulf %46, %47 : vector<32x32xf32>
    %cst_13 = arith.constant -1.000000e+09 : f32
    %49 = vector.broadcast %cst_13 : f32 to vector<32x32xf32>
    %50 = arith.select %43, %48, %49 : vector<32x32xi1>, vector<32x32xf32>
    %cst_14 = arith.constant dense<0xFF800000> : vector<32xf32>
    %51 = vector.multi_reduction <maximumf>, %50, %cst_14 [1] : vector<32x32xf32> to vector<32xf32>
    %52 = vector.shape_cast %51 : vector<32xf32> to vector<32x1xf32>
    %53 = vector.broadcast %52 : vector<32x1xf32> to vector<32x32xf32>
    %54 = arith.subf %50, %53 : vector<32x32xf32>
    %55 = math.exp %54 : vector<32x32xf32>
    %cst_15 = arith.constant dense<0.000000e+00> : vector<32xf32>
    %56 = vector.multi_reduction <add>, %55, %cst_15 [1] : vector<32x32xf32> to vector<32xf32>
    %57 = vector.shape_cast %56 : vector<32xf32> to vector<32x1xf32>
    %58 = tpu.reciprocal %57 {approx = true} : vector<32x1xf32> -> vector<32x1xf32>
    %59 = vector.broadcast %58 : vector<32x1xf32> to vector<32x32xf32>
    %60 = arith.mulf %55, %59 : vector<32x32xf32>
    %61 = arith.truncf %60 : vector<32x32xf32> to vector<32x32xbf16>
    %62 = arith.truncf %34 : vector<32x16xf32> to vector<32x16xbf16>
    %cst_16 = arith.constant dense<0.000000e+00> : vector<32x16xf32>
    %63 = tpu.matmul %61, %62, %cst_16 {dimension_numbers = #tpu.dot_dimension_numbers<[1], [0], [0], [1], [0, 0, 1, 1], [], []>} : vector<32x32xbf16>, vector<32x16xbf16>, vector<32x16xf32> -> vector<32x16xf32>
    %64 = vector.extract_strided_slice %63 {offsets = [0, 0], sizes = [16, 16], strides = [1, 1]} : vector<32x16xf32> to vector<16x16xf32>
    %65 = vector.extract_strided_slice %63 {offsets = [16, 0], sizes = [16, 16], strides = [1, 1]} : vector<32x16xf32> to vector<16x16xf32>
    %66 = tpu.concatenate %64, %65 in 1 : vector<16x16xf32>, vector<16x16xf32> -> vector<16x32xf32>
    %67 = arith.truncf %66 : vector<16x32xf32> to vector<16x32xbf16>
    %c0_17 = arith.constant 0 : index
    %c0_18 = arith.constant 0 : index
    %68 = vector.load %arg4[%c0_17, %c0_18] : memref<32x32xbf16, #tpu.memory_space<vmem>>, vector<32x32xbf16>
    %cst_19 = arith.constant dense<0.000000e+00> : vector<16x32xf32>
    %69 = tpu.matmul %67, %68, %cst_19 {dimension_numbers = #tpu.dot_dimension_numbers<[1], [0], [0], [1], [0, 0, 1, 1], [], []>} : vector<16x32xbf16>, vector<32x32xbf16>, vector<16x32xf32> -> vector<16x32xf32>
    %70 = vector.broadcast %4 : vector<1x32xf32> to vector<16x32xf32>
    %71 = arith.addf %69, %70 : vector<16x32xf32>
    %72 = arith.addf %20, %71 : vector<16x32xf32>
    %cst_20 = arith.constant dense<0.000000e+00> : vector<16xf32>
    %73 = vector.multi_reduction <add>, %72, %cst_20 [1] : vector<16x32xf32> to vector<16xf32>
    %74 = vector.shape_cast %73 : vector<16xf32> to vector<16x1xf32>
    %cst_21 = arith.constant 3.200000e+01 : f32
    %75 = vector.broadcast %cst_21 : f32 to vector<16x1xf32>
    %76 = arith.divf %74, %75 : vector<16x1xf32>
    %77 = vector.broadcast %76 : vector<16x1xf32> to vector<16x32xf32>
    %78 = arith.subf %72, %77 : vector<16x32xf32>
    %79 = arith.mulf %78, %78 : vector<16x32xf32>
    %cst_22 = arith.constant dense<0.000000e+00> : vector<16xf32>
    %80 = vector.multi_reduction <add>, %79, %cst_22 [1] : vector<16x32xf32> to vector<16xf32>
    %81 = vector.shape_cast %80 : vector<16xf32> to vector<16x1xf32>
    %cst_23 = arith.constant 3.200000e+01 : f32
    %82 = vector.broadcast %cst_23 : f32 to vector<16x1xf32>
    %83 = arith.divf %81, %82 : vector<16x1xf32>
    %84 = vector.broadcast %76 : vector<16x1xf32> to vector<16x32xf32>
    %85 = arith.subf %72, %84 : vector<16x32xf32>
    %cst_24 = arith.constant 9.99999974E-6 : f32
    %86 = vector.broadcast %cst_24 : f32 to vector<16x1xf32>
    %87 = arith.addf %83, %86 : vector<16x1xf32>
    %88 = math.rsqrt %87 : vector<16x1xf32>
    %89 = vector.broadcast %88 : vector<16x1xf32> to vector<16x32xf32>
    %90 = arith.mulf %85, %89 : vector<16x32xf32>
    %91 = vector.broadcast %5 : vector<1x32xf32> to vector<16x32xf32>
    %92 = arith.mulf %90, %91 : vector<16x32xf32>
    %93 = vector.broadcast %6 : vector<1x32xf32> to vector<16x32xf32>
    %94 = arith.addf %92, %93 : vector<16x32xf32>
    %95 = arith.truncf %94 : vector<16x32xf32> to vector<16x32xbf16>
    %c0_25 = arith.constant 0 : index
    %c0_26 = arith.constant 0 : index
    %96 = vector.load %arg5[%c0_25, %c0_26] : memref<32x64xbf16, #tpu.memory_space<vmem>>, vector<32x64xbf16>
    %cst_27 = arith.constant dense<0.000000e+00> : vector<16x64xf32>
    %97 = tpu.matmul %95, %96, %cst_27 {dimension_numbers = #tpu.dot_dimension_numbers<[1], [0], [0], [1], [0, 0, 1, 1], [], []>} : vector<16x32xbf16>, vector<32x64xbf16>, vector<16x64xf32> -> vector<16x64xf32>
    %98 = vector.broadcast %2 : vector<1x64xf32> to vector<16x64xf32>
    %99 = arith.addf %97, %98 : vector<16x64xf32>
    %cst_28 = arith.constant 0.000000e+00 : f32
    %100 = vector.broadcast %cst_28 : f32 to vector<16x64xf32>
    %101 = arith.maximumf %99, %100 : vector<16x64xf32>
    %102 = arith.truncf %101 : vector<16x64xf32> to vector<16x64xbf16>
    %c0_29 = arith.constant 0 : index
    %c0_30 = arith.constant 0 : index
    %103 = vector.load %arg6[%c0_29, %c0_30] : memref<64x32xbf16, #tpu.memory_space<vmem>>, vector<64x32xbf16>
    %cst_31 = arith.constant dense<0.000000e+00> : vector<16x32xf32>
    %104 = tpu.matmul %102, %103, %cst_31 {dimension_numbers = #tpu.dot_dimension_numbers<[1], [0], [0], [1], [0, 0, 1, 1], [], []>} : vector<16x64xbf16>, vector<64x32xbf16>, vector<16x32xf32> -> vector<16x32xf32>
    %105 = vector.broadcast %7 : vector<1x32xf32> to vector<16x32xf32>
    %106 = arith.addf %104, %105 : vector<16x32xf32>
    %107 = arith.addf %94, %106 : vector<16x32xf32>
    %cst_32 = arith.constant dense<0.000000e+00> : vector<16xf32>
    %108 = vector.multi_reduction <add>, %107, %cst_32 [1] : vector<16x32xf32> to vector<16xf32>
    %109 = vector.shape_cast %108 : vector<16xf32> to vector<16x1xf32>
    %cst_33 = arith.constant 3.200000e+01 : f32
    %110 = vector.broadcast %cst_33 : f32 to vector<16x1xf32>
    %111 = arith.divf %109, %110 : vector<16x1xf32>
    %112 = vector.broadcast %111 : vector<16x1xf32> to vector<16x32xf32>
    %113 = arith.subf %107, %112 : vector<16x32xf32>
    %114 = arith.mulf %113, %113 : vector<16x32xf32>
    %cst_34 = arith.constant dense<0.000000e+00> : vector<16xf32>
    %115 = vector.multi_reduction <add>, %114, %cst_34 [1] : vector<16x32xf32> to vector<16xf32>
    %116 = vector.shape_cast %115 : vector<16xf32> to vector<16x1xf32>
    %cst_35 = arith.constant 3.200000e+01 : f32
    %117 = vector.broadcast %cst_35 : f32 to vector<16x1xf32>
    %118 = arith.divf %116, %117 : vector<16x1xf32>
    %119 = vector.broadcast %111 : vector<16x1xf32> to vector<16x32xf32>
    %120 = arith.subf %107, %119 : vector<16x32xf32>
    %cst_36 = arith.constant 9.99999974E-6 : f32
    %121 = vector.broadcast %cst_36 : f32 to vector<16x1xf32>
    %122 = arith.addf %118, %121 : vector<16x1xf32>
    %123 = math.rsqrt %122 : vector<16x1xf32>
    %124 = vector.broadcast %123 : vector<16x1xf32> to vector<16x32xf32>
    %125 = arith.mulf %120, %124 : vector<16x32xf32>
    %126 = vector.broadcast %8 : vector<1x32xf32> to vector<16x32xf32>
    %127 = arith.mulf %125, %126 : vector<16x32xf32>
    %128 = vector.broadcast %9 : vector<1x32xf32> to vector<16x32xf32>
    %129 = arith.addf %127, %128 : vector<16x32xf32>
    %130 = arith.truncf %129 : vector<16x32xf32> to vector<16x32xbf16>
    %c0_37 = arith.constant 0 : index
    %c0_38 = arith.constant 0 : index
    %131 = vector.load %arg7[%c0_37, %c0_38] : memref<32x128xbf16, #tpu.memory_space<vmem>>, vector<32x128xbf16>
    %cst_39 = arith.constant dense<0.000000e+00> : vector<16x128xf32>
    %132 = tpu.matmul %130, %131, %cst_39 {dimension_numbers = #tpu.dot_dimension_numbers<[1], [0], [0], [1], [0, 0, 1, 1], [], []>} : vector<16x32xbf16>, vector<32x128xbf16>, vector<16x128xf32> -> vector<16x128xf32>
    %133 = vector.broadcast %3 : vector<1x128xf32> to vector<16x128xf32>
    %134 = arith.addf %132, %133 : vector<16x128xf32>
    %c0_40 = arith.constant 0 : index
    %c0_41 = arith.constant 0 : index
    %135 = vector.load %arg9[%c0_40, %c0_41] : memref<16x128xf32, #tpu.memory_space<vmem>>, vector<16x128xf32>
    tpu.vector_store %arg9[%c0_40, %c0_41], %134 {strides = array<i32>} : memref<16x128xf32, #tpu.memory_space<vmem>>, vector<16x128xf32>,
    return
  }
}

</mosaic_0001>

<llo_original>
// kernel: gpt_forward.1
$region0: #{gpt_forward.1}
  #allocation0 [shape = 'u32[]', space=smem, size = 0x4, offset = 0x4, fixed_abs, tag = 'smem constant byte address 0x4 - core index']
  #allocation1 [shape = 'u32[72,128]{1,0:T(1,128)}', space=vmem, size = 0x9000, scoped, tag = 'internal scratch']
  %s0 = inlined_call_operand.vmem [shape: s32[16,1], index: 0, kind: input, shape index: {}]
  %s1 = inlined_call_operand.vmem [shape: f32[16,32], index: 1, kind: input, shape index: {}]
  %s2 = inlined_call_operand.vmem [shape: bf16[64,32], index: 2, kind: input, shape index: {}]
  %s3 = inlined_call_operand.vmem [shape: bf16[32,96], index: 3, kind: input, shape index: {}]
  %s4 = inlined_call_operand.vmem [shape: bf16[32,32], index: 4, kind: input, shape index: {}]
  %s5 = inlined_call_operand.vmem [shape: bf16[32,64], index: 5, kind: input, shape index: {}]
  %s6 = inlined_call_operand.vmem [shape: bf16[64,32], index: 6, kind: input, shape index: {}]
  %s7 = inlined_call_operand.vmem [shape: bf16[32,128], index: 7, kind: input, shape index: {}]
  %s8 = inlined_call_operand.vmem [shape: f32[8,128], index: 8, kind: input, shape index: {}]
  %s9 = inlined_call_operand.vmem [shape: f32[16,128], index: 9, kind: output, shape index: {}]
  %s10 = sld [smem:[#allocation0]]
  $region46: #{gpt_forward.1} parent=0
    _
  %s12 = ssub.s32 1, %s10
  %s13 = scalar_select 0, %s12, %s10
  // Predicated region
  $region2: #{gpt_forward.1} parent=0 // pred_check
    _
  $region3: #{gpt_forward.1} parent=0 // pred_check_branch
    %15 = sbr.rel (0) target = $region5
  $region4: #{gpt_forward.1} parent=0 // pred_region
    _
  $region5: #{gpt_forward.1} parent=0 // pred_fallthru
    _
  // Predicated region
  $region6: #{gpt_forward.1} parent=0 // pred_check
    _
  $region7: #{gpt_forward.1} parent=0 // pred_check_branch
    %17 = sbr.rel (0) target = $region9
  $region8: #{gpt_forward.1} parent=0 // pred_region
    _
  $region9: #{gpt_forward.1} parent=0 // pred_fallthru
    _
  // Predicated region
  $region10: #{gpt_forward.1} parent=0 // pred_check
    _
  $region11: #{gpt_forward.1} parent=0 // pred_check_branch
    %19 = sbr.rel (0) target = $region13
  $region12: #{gpt_forward.1} parent=0 // pred_region
    _
  $region13: #{gpt_forward.1} parent=0 // pred_fallthru
    _
  // Predicated region
  $region14: #{gpt_forward.1} parent=0 // pred_check
    _
  $region15: #{gpt_forward.1} parent=0 // pred_check_branch
    %21 = sbr.rel (0) target = $region17
  $region16: #{gpt_forward.1} parent=0 // pred_region
    _
  $region17: #{gpt_forward.1} parent=0 // pred_fallthru
    _
  // Predicated region
  $region18: #{gpt_forward.1} parent=0 // pred_check
    _
  $region19: #{gpt_forward.1} parent=0 // pred_check_branch
    %23 = sbr.rel (0) target = $region21
  $region20: #{gpt_forward.1} parent=0 // pred_region
    _
  $region21: #{gpt_forward.1} parent=0 // pred_fallthru
    _
  // Predicated region
  $region22: #{gpt_forward.1} parent=0 // pred_check
    _
  $region23: #{gpt_forward.1} parent=0 // pred_check_branch
    %25 = sbr.rel (0) target = $region25
  $region24: #{gpt_forward.1} parent=0 // pred_region
    _
  $region25: #{gpt_forward.1} parent=0 // pred_fallthru
    _
  // Predicated region
  $region26: #{gpt_forward.1} parent=0 // pred_check
    _
  $region27: #{gpt_forward.1} parent=0 // pred_check_branch
    %27 = sbr.rel (0) target = $region29
  $region28: #{gpt_forward.1} parent=0 // pred_region
    _
  $region29: #{gpt_forward.1} parent=0 // pred_fallthru
    _
  // Predicated region
  $region30: #{gpt_forward.1} parent=0 // pred_check
    _
  $region31: #{gpt_forward.1} parent=0 // pred_check_branch
    %29 = sbr.rel (0) target = $region33
  $region32: #{gpt_forward.1} parent=0 // pred_region
    _
  $region33: #{gpt_forward.1} parent=0 // pred_fallthru
    _
  // Predicated region
  $region34: #{gpt_forward.1} parent=0 // pred_check
    _
  $region35: #{gpt_forward.1} parent=0 // pred_check_branch
    %31 = sbr.rel (0) target = $region37
  $region36: #{gpt_forward.1} parent=0 // pred_region
    _
  $region37: #{gpt_forward.1} parent=0 // pred_fallthru
    _
  %v33 = vld [vmem:[%s8] sm:$0xff]
  %v34 = vld [vmem:[%s0] sm:$0xff]
  %v35 = vld [vmem:[%s0 + $0x8] sm:$0xff]
  %v36 = vlaneseq
  %v37 = vand.u32 %v36, 127
  %38 = vset.pattern.permute.xlu0 0
  %39 = vperm.xlu0 %38, %v34
  %v40 = vpop.permute.xlu0 %39
  %41 = vset.pattern.permute.xlu0 0
  %42 = vperm.xlu0 %41, %v35
  %v43 = vpop.permute.xlu0 %42
  %vm44 = vcmp.eq.s32.totalorder %v37, %v40
  %vm45 = vcmp.eq.s32.totalorder %v37, %v43
  %v46 = vsel %vm44, 1, 0
  %v47 = vsel %vm45, 1, 0
  %v48 = vcvt.s32.f32 %v46
  %v49 = vcvt.s32.f32 %v47
  %v50 = vpack.c.bf16 %v49, %v48
  %v51 = vld [vmem:[%s2] sm:$0xf]
  %v52 = vld [vmem:[%s2 + $0x4] sm:$0xf]
  %v53 = vld [vmem:[%s2 + $0x8] sm:$0xf]
  %v54 = vld [vmem:[%s2 + $0xc] sm:$0xf]
  %v55 = vld [vmem:[%s2 + $0x10] sm:$0xf]
  %v56 = vld [vmem:[%s2 + $0x14] sm:$0xf]
  %v57 = vld [vmem:[%s2 + $0x18] sm:$0xf]
  %v58 = vld [vmem:[%s2 + $0x1c] sm:$0xf]
  %v59 = vld [vmem:[%s1] sm:$0xff]
  %v60 = vld [vmem:[%s1 + $0x8] sm:$0xff]
  %v69 = vunpack.c.l.b16 %v51
  %v70 = vunpack.c.l.b16 %v52
  %v71 = vunpack.c.l.b16 %v53
  %v72 = vunpack.c.l.b16 %v54
  %v73 = vunpack.c.l.b16 %v55
  %v74 = vunpack.c.l.b16 %v56
  %v75 = vunpack.c.l.b16 %v57
  %v76 = vunpack.c.l.b16 %v58
  %v77 = vpack.c.b16 %v70, %v69
  %v78 = vpack.c.b16 %v72, %v71
  %v79 = vpack.c.b16 %v74, %v73
  %v80 = vpack.c.b16 %v76, %v75
  %vm85 = vcmask 523264
  %v87 = vsel %vm85, %v50, 0
  %89 = vmatpush.bf16.msra.mxu0 0
  %90 = vmatpush.bf16.msra.mxu0 0
  %91 = vmatpush.bf16.msra.mxu0 0
  %92 = vmatpush.bf16.msra.mxu0 0
  %93 = vmatpush.bf16.msra.mxu0 %v80
  %94 = vmatpush.bf16.msra.mxu0 %v79
  %95 = vmatpush.bf16.msra.mxu0 %v78
  %96 = vmatpush.bf16.msra.mxu0 %v77
  %97 = vmatmul.bf16.gmra.mxu0 %v87
  %v98 = vpop.f32.mrf.mxu0
  %v99 = vadd.f32 %v59, %v98
  %v100 = vpop.f32.mrf.mxu0
  %v101 = vadd.f32 %v60, %v100
  %102 = vdwg.mxu0
  %v103 = vpack.c.bf16 %v101, %v99
  %v104 = vld [vmem:[%s3] sm:$0xf]
  %v105 = vld [vmem:[%s3 + $0x4] sm:$0xf]
  %v106 = vld [vmem:[%s3 + $0x8] sm:$0xf]
  %v107 = vld [vmem:[%s3 + $0xc] sm:$0xf]
  %v108 = vperm.slane %v33, 0
  %v113 = vunpack.c.l.b16 %v104
  %v114 = vunpack.c.l.b16 %v105
  %v115 = vunpack.c.l.b16 %v106
  %v116 = vunpack.c.l.b16 %v107
  %v117 = vpack.c.b16 %v114, %v113
  %v118 = vpack.c.b16 %v116, %v115
  %vm121 = vcmask 261120
  %v123 = vsel %vm121, %v103, 0
  %125 = vmatpush.bf16.msra.mxu0 0
  %126 = vmatpush.bf16.msra.mxu0 0
  %127 = vmatpush.bf16.msra.mxu0 0
  %128 = vmatpush.bf16.msra.mxu0 0
  %129 = vmatpush.bf16.msra.mxu0 0
  %130 = vmatpush.bf16.msra.mxu0 0
  %131 = vmatpush.bf16.msra.mxu0 %v118
  %132 = vmatpush.bf16.msra.mxu0 %v117
  %133 = vmatmul.bf16.gmra.mxu0 %v123
  %v134 = vpop.f32.mrf.mxu0
  %v135 = vadd.f32 %v108, %v134
  %v136 = vpop.f32.mrf.mxu0
  %v137 = vadd.f32 %v108, %v136
  %138 = vdwg.mxu0
  %141 = vrot.lane.b32.xlu0 %v135, 112
  %v142 = vpop.permute.xlu0 %141
  %143 = vrot.lane.b32.xlu0 %v137, 112
  %v144 = vpop.permute.xlu0 %143
  %v147 = vlaneseq
  %v148 = vshrl.u32 %v147, 7
  %v149 = vadd.s32 %v148, 8
  %v150 = vadd.s32 %v148, 16
  %v151 = vadd.s32 %v148, 24
  %v152 = vshra.s32 %v148, 3
  %v153 = vshra.s32 %v149, 3
  %v154 = vshra.s32 %v150, 3
  %v155 = vshra.s32 %v151, 3
  %v156 = vshra.s32 %v37, 3
  %vm157 = vcmp.eq.s32.totalorder %v152, %v156
  %vm158 = vcmp.eq.s32.totalorder %v153, %v156
  %vm159 = vcmp.eq.s32.totalorder %v154, %v156
  %vm160 = vcmp.eq.s32.totalorder %v155, %v156
  %vm161 = vcmp.ge.s32.totalorder %v148, %v37
  %vm162 = vcmp.ge.s32.totalorder %v149, %v37
  %vm163 = vcmp.ge.s32.totalorder %v150, %v37
  %vm164 = vcmp.ge.s32.totalorder %v151, %v37
  %vm165 = vmand %vm157, %vm161
  %vm166 = vmand %vm158, %vm162
  %vm167 = vmand %vm159, %vm163
  %vm168 = vmand %vm160, %vm164
  %v169 = vpack.c.bf16 %v137, %v135
  %v170 = vpack.c.bf16 %v144, %v142
  %173 = vrot.lane.b32.xlu0 %v169, 96
  %v174 = vpop.permute.xlu0 %173
  %175 = vrot.lane.b32.xlu0 %v170, 96
  %v176 = vpop.permute.xlu0 %175
  %vm177 = vcmask 130048
  %v179 = vsel %vm177, %v169, 0
  %v182 = vsel %vm177, %v170, 0
  %v185 = vsel %vm177, %v174, 0
  %v188 = vsel %vm177, %v176, 0
  %190 = vmatpush.bf16.xpose.msra.mxu0 0
  %191 = vmatpush.bf16.xpose.msra.mxu0 0
  %192 = vmatpush.bf16.xpose.msra.mxu0 0
  %193 = vmatpush.bf16.xpose.msra.mxu0 0
  %194 = vmatpush.bf16.xpose.msra.mxu0 0
  %195 = vmatpush.bf16.xpose.msra.mxu0 0
  %196 = vmatpush.bf16.xpose.msra.mxu0 %v188
  %197 = vmatpush.bf16.xpose.msra.mxu0 %v185
  %198 = vmatmul.bf16.gmra.mxu0 %v179
  %v199 = vpop.f32.mrf.mxu0
  %v200 = vadd.f32 0.0, %v199
  %v201 = vpop.f32.mrf.mxu0
  %v202 = vadd.f32 0.0, %v201
  %203 = vmatmul.bf16.gmra.mxu0 %v182
  %v204 = vpop.f32.mrf.mxu0
  %v205 = vadd.f32 0.0, %v204
  %v206 = vpop.f32.mrf.mxu0
  %v207 = vadd.f32 0.0, %v206
  %208 = vdwg.mxu0
  %v209 = vmul.f32 %v200, 0.25
  %v210 = vmul.f32 %v202, 0.25
  %v211 = vmul.f32 %v205, 0.25
  %v212 = vmul.f32 %v207, 0.25
  %v213 = vsel %vm165, %v209, -1e+09
  %v214 = vsel %vm166, %v210, -1e+09
  %v215 = vsel %vm167, %v211, -1e+09
  %v216 = vsel %vm168, %v212, -1e+09
  %v217 = vsel %vm121, %v213, -inf
  %218 = vmax.xlane.f32.xlu0 %v217
  %v219 = vpop.xlane.xlu0 %218
  %v220 = vsel %vm121, %v214, -inf
  %221 = vmax.xlane.f32.xlu0 %v220
  %v222 = vpop.xlane.xlu0 %221
  %v223 = vsel %vm121, %v215, -inf
  %224 = vmax.xlane.f32.xlu0 %v223
  %v225 = vpop.xlane.xlu0 %224
  %v226 = vsel %vm121, %v216, -inf
  %227 = vmax.xlane.f32.xlu0 %v226
  %v228 = vpop.xlane.xlu0 %227
  %v229 = vsub.f32 %v213, %v219
  %v230 = vsub.f32 %v214, %v222
  %v231 = vsub.f32 %v215, %v225
  %v232 = vsub.f32 %v216, %v228
  %v233 = vmul.f32 %v229, 1.442695
  %v234 = vpow.pop %v233
  %v235 = vmul.f32 %v230, 1.442695
  %v236 = vpow.pop %v235
  %v237 = vmul.f32 %v231, 1.442695
  %v238 = vpow.pop %v237
  %v239 = vmul.f32 %v232, 1.442695
  %v240 = vpow.pop %v239
  %v241 = vsel %vm121, %v234, 0.0
  %242 = vadd.xlane.f32.xlu0 %v241
  %v243 = vpop.xlane.xlu0 %242
  %v244 = vsel %vm121, %v236, 0.0
  %245 = vadd.xlane.f32.xlu0 %v244
  %v246 = vpop.xlane.xlu0 %245
  %v247 = vsel %vm121, %v238, 0.0
  %248 = vadd.xlane.f32.xlu0 %v247
  %v249 = vpop.xlane.xlu0 %248
  %v250 = vsel %vm121, %v240, 0.0
  %251 = vadd.xlane.f32.xlu0 %v250
  %v252 = vpop.xlane.xlu0 %251
  %v253 = vrcp.pop %v243
  %v254 = vrcp.pop %v246
  %v255 = vrcp.pop %v249
  %v256 = vrcp.pop %v252
  %v257 = vmul.f32 %v234, %v253
  %v258 = vmul.f32 %v236, %v254
  %v259 = vmul.f32 %v238, %v255
  %v260 = vmul.f32 %v240, %v256
  %v261 = vpack.c.bf16 %v258, %v257
  %v262 = vpack.c.bf16 %v260, %v259
  %263 = vrot.lane.b32.xlu0 %v169, 64
  %v264 = vpop.permute.xlu0 %263
  %265 = vrot.lane.b32.xlu0 %v170, 64
  %v266 = vpop.permute.xlu0 %265
  %v270 = vsel %vm121, %v261, 0
  %v273 = vsel %vm121, %v262, 0
  %275 = vmatpush.bf16.msra.mxu0 0
  %276 = vmatpush.bf16.msra.mxu0 0
  %277 = vmatpush.bf16.msra.mxu0 0
  %278 = vmatpush.bf16.msra.mxu0 0
  %279 = vmatpush.bf16.msra.mxu0 0
  %280 = vmatpush.bf16.msra.mxu0 0
  %281 = vmatpush.bf16.msra.mxu0 %v266
  %282 = vmatpush.bf16.msra.mxu0 %v264
  %283 = vmatmul.bf16.gmra.mxu0 %v270
  %v284 = vpop.f32.mrf.mxu0
  %v285 = vadd.f32 0.0, %v284
  %v286 = vpop.f32.mrf.mxu0
  %v287 = vadd.f32 0.0, %v286
  %288 = vmatmul.bf16.gmra.mxu0 %v273
  %v289 = vpop.f32.mrf.mxu0
  %v290 = vadd.f32 0.0, %v289
  %v291 = vpop.f32.mrf.mxu0
  %v292 = vadd.f32 0.0, %v291
  %293 = vdwg.mxu0
  %296 = vrot.lane.b32.xlu0 %v290, 16
  %v297 = vpop.permute.xlu0 %296
  %298 = vrot.lane.b32.xlu0 %v292, 16
  %v299 = vpop.permute.xlu0 %298
  %v302 = vsel %vm177, %v285, %v297
  %v303 = vsel %vm177, %v287, %v299
  %v304 = vpack.c.bf16 %v303, %v302
  %v305 = vld [vmem:[%s4] sm:$0xf]
  %v306 = vld [vmem:[%s4 + $0x4] sm:$0xf]
  %v307 = vld [vmem:[%s4 + $0x8] sm:$0xf]
  %v308 = vld [vmem:[%s4 + $0xc] sm:$0xf]
  %v309 = vperm.slane %v33, 3
  %v314 = vunpack.c.l.b16 %v305
  %v315 = vunpack.c.l.b16 %v306
  %v316 = vunpack.c.l.b16 %v307
  %v317 = vunpack.c.l.b16 %v308
  %v318 = vpack.c.b16 %v315, %v314
  %v319 = vpack.c.b16 %v317, %v316
  %v323 = vsel %vm121, %v304, 0
  %325 = vmatpush.bf16.msra.mxu0 0
  %326 = vmatpush.bf16.msra.mxu0 0
  %327 = vmatpush.bf16.msra.mxu0 0
  %328 = vmatpush.bf16.msra.mxu0 0
  %329 = vmatpush.bf16.msra.mxu0 0
  %330 = vmatpush.bf16.msra.mxu0 0
  %331 = vmatpush.bf16.msra.mxu0 %v319
  %332 = vmatpush.bf16.msra.mxu0 %v318
  %333 = vmatmul.bf16.gmra.mxu0 %v323
  %v334 = vpop.f32.mrf.mxu0
  %v335 = vadd.f32 %v309, %v334
  %v336 = vpop.f32.mrf.mxu0
  %v337 = vadd.f32 %v309, %v336
  %338 = vdwg.mxu0
  %v339 = vadd.f32 %v99, %v335
  %v340 = vadd.f32 %v101, %v337
  %v341 = vsel %vm121, %v339, 0.0
  %342 = vadd.xlane.f32.xlu0 %v341
  %v343 = vpop.xlane.xlu0 %342
  %v344 = vsel %vm121, %v340, 0.0
  %345 = vadd.xlane.f32.xlu0 %v344
  %v346 = vpop.xlane.xlu0 %345
  %v347 = vrcp.pop 32.0
  %v348 = vmul.f32 32.0, %v347
  %v349 = vsub.f32 1.0, %v348
  %v350 = vmul.f32 %v347, %v349
  %v351 = vadd.f32 %v347, %v350
  %vm352 = vweird.f32 %v347
  %v353 = vsel %vm352, %v347, %v351
  %v354 = vmul.f32 %v343, %v353
  %v355 = vmul.f32 %v346, %v353
  %v356 = vsub.f32 %v339, %v354
  %v357 = vsub.f32 %v340, %v355
  %v358 = vmul.f32 %v356, %v356
  %v359 = vmul.f32 %v357, %v357
  %v360 = vsel %vm121, %v358, 0.0
  %361 = vadd.xlane.f32.xlu0 %v360
  %v362 = vpop.xlane.xlu0 %361
  %v363 = vsel %vm121, %v359, 0.0
  %364 = vadd.xlane.f32.xlu0 %v363
  %v365 = vpop.xlane.xlu0 %364
  %v366 = vmul.f32 %v362, %v353
  %v367 = vmul.f32 %v365, %v353
  %v368 = vadd.f32 %v366, 1e-05
  %v369 = vadd.f32 %v367, 1e-05
  %v370 = vrsqrt.pop %v368
  %v371 = vmul.f32 %v370, %v368
  %v372 = vmul.f32 %v371, %v370
  %v373 = vmul.f32 0.5, %v372
  %v374 = vsub.f32 1.5, %v373
  %v375 = vmul.f32 %v370, %v374
  %vm376 = vweird.f32 %v368
  %vm377 = vweird.f32 %v370
  %vm378 = vmor %vm376, %vm377
  %v379 = vsel %vm378, %v370, %v375
  %v380 = vrsqrt.pop %v369
  %v381 = vmul.f32 %v380, %v369
  %v382 = vmul.f32 %v381, %v380
  %v383 = vmul.f32 0.5, %v382
  %v384 = vsub.f32 1.5, %v383
  %v385 = vmul.f32 %v380, %v384
  %vm386 = vweird.f32 %v369
  %vm387 = vweird.f32 %v380
  %vm388 = vmor %vm386, %vm387
  %v389 = vsel %vm388, %v380, %v385
  %v390 = vmul.f32 %v356, %v379
  %v391 = vmul.f32 %v357, %v389
  %393 = vrot.lane.b32.xlu0 %v309, 96
  %v394 = vpop.permute.xlu0 %393
  %v396 = vmul.f32 %v390, %v394
  %v397 = vmul.f32 %v391, %v394
  %398 = vrot.lane.b32.xlu0 %v309, 64
  %v399 = vpop.permute.xlu0 %398
  %v401 = vadd.f32 %v396, %v399
  %v402 = vadd.f32 %v397, %v399
  %v403 = vpack.c.bf16 %v402, %v401
  %v404 = vld [vmem:[%s5] sm:$0xf]
  %v405 = vld [vmem:[%s5 + $0x4] sm:$0xf]
  %v406 = vld [vmem:[%s5 + $0x8] sm:$0xf]
  %v407 = vld [vmem:[%s5 + $0xc] sm:$0xf]
  %v408 = vperm.slane %v33, 1
  %v413 = vunpack.c.l.b16 %v404
  %v414 = vunpack.c.l.b16 %v405
  %v415 = vunpack.c.l.b16 %v406
  %v416 = vunpack.c.l.b16 %v407
  %v417 = vpack.c.b16 %v414, %v413
  %v418 = vpack.c.b16 %v416, %v415
  %v422 = vsel %vm121, %v403, 0
  %424 = vmatpush.bf16.msra.mxu0 0
  %425 = vmatpush.bf16.msra.mxu0 0
  %426 = vmatpush.bf16.msra.mxu0 0
  %427 = vmatpush.bf16.msra.mxu0 0
  %428 = vmatpush.bf16.msra.mxu0 0
  %429 = vmatpush.bf16.msra.mxu0 0
  %430 = vmatpush.bf16.msra.mxu0 %v418
  %431 = vmatpush.bf16.msra.mxu0 %v417
  %432 = vmatmul.bf16.gmra.mxu0 %v422
  %v433 = vpop.f32.mrf.mxu0
  %v434 = vadd.f32 %v408, %v433
  %v435 = vpop.f32.mrf.mxu0
  %v436 = vadd.f32 %v408, %v435
  %437 = vdwg.mxu0
  %v438 = vmax.f32 %v434, 0.0
  %v439 = vmax.f32 %v436, 0.0
  %v440 = vpack.c.bf16 %v439, %v438
  %v441 = vld [vmem:[%s6] sm:$0xf]
  %v442 = vld [vmem:[%s6 + $0x4] sm:$0xf]
  %v443 = vld [vmem:[%s6 + $0x8] sm:$0xf]
  %v444 = vld [vmem:[%s6 + $0xc] sm:$0xf]
  %v445 = vld [vmem:[%s6 + $0x10] sm:$0xf]
  %v446 = vld [vmem:[%s6 + $0x14] sm:$0xf]
  %v447 = vld [vmem:[%s6 + $0x18] sm:$0xf]
  %v448 = vld [vmem:[%s6 + $0x1c] sm:$0xf]
  %v449 = vperm.slane %v33, 4
  %v458 = vunpack.c.l.b16 %v441
  %v459 = vunpack.c.l.b16 %v442
  %v460 = vunpack.c.l.b16 %v443
  %v461 = vunpack.c.l.b16 %v444
  %v462 = vunpack.c.l.b16 %v445
  %v463 = vunpack.c.l.b16 %v446
  %v464 = vunpack.c.l.b16 %v447
  %v465 = vunpack.c.l.b16 %v448
  %v466 = vpack.c.b16 %v459, %v458
  %v467 = vpack.c.b16 %v461, %v460
  %v468 = vpack.c.b16 %v463, %v462
  %v469 = vpack.c.b16 %v465, %v464
  %v475 = vsel %vm85, %v440, 0
  %477 = vmatpush.bf16.msra.mxu0 0
  %478 = vmatpush.bf16.msra.mxu0 0
  %479 = vmatpush.bf16.msra.mxu0 0
  %480 = vmatpush.bf16.msra.mxu0 0
  %481 = vmatpush.bf16.msra.mxu0 %v469
  %482 = vmatpush.bf16.msra.mxu0 %v468
  %483 = vmatpush.bf16.msra.mxu0 %v467
  %484 = vmatpush.bf16.msra.mxu0 %v466
  %485 = vmatmul.bf16.gmra.mxu0 %v475
  %v486 = vpop.f32.mrf.mxu0
  %v487 = vadd.f32 %v449, %v486
  %v488 = vpop.f32.mrf.mxu0
  %v489 = vadd.f32 %v449, %v488
  %490 = vdwg.mxu0
  %v491 = vadd.f32 %v401, %v487
  %v492 = vadd.f32 %v402, %v489
  %v493 = vsel %vm121, %v491, 0.0
  %494 = vadd.xlane.f32.xlu0 %v493
  %v495 = vpop.xlane.xlu0 %494
  %v496 = vsel %vm121, %v492, 0.0
  %497 = vadd.xlane.f32.xlu0 %v496
  %v498 = vpop.xlane.xlu0 %497
  %v499 = vmul.f32 %v495, %v353
  %v500 = vmul.f32 %v498, %v353
  %v501 = vsub.f32 %v491, %v499
  %v502 = vsub.f32 %v492, %v500
  %v503 = vmul.f32 %v501, %v501
  %v504 = vmul.f32 %v502, %v502
  %v505 = vsel %vm121, %v503, 0.0
  %506 = vadd.xlane.f32.xlu0 %v505
  %v507 = vpop.xlane.xlu0 %506
  %v508 = vsel %vm121, %v504, 0.0
  %509 = vadd.xlane.f32.xlu0 %v508
  %v510 = vpop.xlane.xlu0 %509
  %v511 = vmul.f32 %v507, %v353
  %v512 = vmul.f32 %v510, %v353
  %v513 = vadd.f32 %v511, 1e-05
  %v514 = vadd.f32 %v512, 1e-05
  %v515 = vrsqrt.pop %v513
  %v516 = vmul.f32 %v515, %v513
  %v517 = vmul.f32 %v516, %v515
  %v518 = vmul.f32 0.5, %v517
  %v519 = vsub.f32 1.5, %v518
  %v520 = vmul.f32 %v515, %v519
  %vm521 = vweird.f32 %v513
  %vm522 = vweird.f32 %v515
  %vm523 = vmor %vm521, %vm522
  %v524 = vsel %vm523, %v515, %v520
  %v525 = vrsqrt.pop %v514
  %v526 = vmul.f32 %v525, %v514
  %v527 = vmul.f32 %v526, %v525
  %v528 = vmul.f32 0.5, %v527
  %v529 = vsub.f32 1.5, %v528
  %v530 = vmul.f32 %v525, %v529
  %vm531 = vweird.f32 %v514
  %vm532 = vweird.f32 %v525
  %vm533 = vmor %vm531, %vm532
  %v534 = vsel %vm533, %v525, %v530
  %v535 = vmul.f32 %v501, %v524
  %v536 = vmul.f32 %v502, %v534
  %538 = vrot.lane.b32.xlu0 %v449, 96
  %v539 = vpop.permute.xlu0 %538
  %v541 = vmul.f32 %v535, %v539
  %v542 = vmul.f32 %v536, %v539
  %543 = vrot.lane.b32.xlu0 %v449, 64
  %v544 = vpop.permute.xlu0 %543
  %v546 = vadd.f32 %v541, %v544
  %v547 = vadd.f32 %v542, %v544
  %v548 = vpack.c.bf16 %v547, %v546
  %v549 = vld [vmem:[%s7] sm:$0xf]
  %v550 = vld [vmem:[%s7 + $0x4] sm:$0xf]
  %v551 = vld [vmem:[%s7 + $0x8] sm:$0xf]
  %v552 = vld [vmem:[%s7 + $0xc] sm:$0xf]
  %v553 = vperm.slane %v33, 2
  %v558 = vunpack.c.l.b16 %v549
  %v559 = vunpack.c.l.b16 %v550
  %v560 = vunpack.c.l.b16 %v551
  %v561 = vunpack.c.l.b16 %v552
  %v562 = vpack.c.b16 %v559, %v558
  %v563 = vpack.c.b16 %v561, %v560
  %v567 = vsel %vm121, %v548, 0
  %569 = vmatpush.bf16.msra.mxu0 0
  %570 = vmatpush.bf16.msra.mxu0 0
  %571 = vmatpush.bf16.msra.mxu0 0
  %572 = vmatpush.bf16.msra.mxu0 0
  %573 = vmatpush.bf16.msra.mxu0 0
  %574 = vmatpush.bf16.msra.mxu0 0
  %575 = vmatpush.bf16.msra.mxu0 %v563
  %576 = vmatpush.bf16.msra.mxu0 %v562
  %577 = vmatmul.bf16.gmra.mxu0 %v567
  %v578 = vpop.f32.mrf.mxu0
  %v579 = vadd.f32 %v553, %v578
  %v580 = vpop.f32.mrf.mxu0
  %v581 = vadd.f32 %v553, %v580
  %582 = vdwg.mxu0
  %583 = vst [vmem:[%s9] sm:$0xff] %v579
  %584 = vst [vmem:[%s9 + $0x8] sm:$0xff] %v581
  // Predicated region
  $region38: #{gpt_forward.1} parent=0 // pred_check
    _
  $region39: #{gpt_forward.1} parent=0 // pred_check_branch
    %586 = sbr.rel (0) target = $region41
  $region40: #{gpt_forward.1} parent=0 // pred_region
    _
  $region41: #{gpt_forward.1} parent=0 // pred_fallthru
    _
  // Predicated region
  $region42: #{gpt_forward.1} parent=0 // pred_check
    _
  $region43: #{gpt_forward.1} parent=0 // pred_check_branch
    %588 = sbr.rel (0) target = $region45
  $region44: #{gpt_forward.1} parent=0 // pred_region
    _
  $region45: #{gpt_forward.1} parent=0 // pred_fallthru
    _

</llo_original>
